<compile_context>
chip_gen: v7x
topology: tpu7x:2x2x1
jax: 0.10.0
libtpu: 0.0.40
codegen_flags: <defaults>
</compile_context>

<pallas_src>
import functools

import jax
import jax.numpy as jnp
from jax.experimental import pallas as pl
from jax.experimental.pallas import tpu as pltpu


def _build_interp_matrix(in_size: int, out_size: int) -> jnp.ndarray:
    """Dense 1-D bilinear interpolation matrix matching PyTorch semantics
    (mode='bilinear', align_corners=False), including edge clamping."""
    scale = in_size / out_size
    dst = jnp.arange(out_size, dtype=jnp.float32)
    src = jnp.maximum((dst + 0.5) * scale - 0.5, 0.0)
    idx0 = jnp.clip(jnp.floor(src).astype(jnp.int32), 0, in_size - 1)
    idx1 = jnp.minimum(idx0 + 1, in_size - 1)
    w1 = src - idx0.astype(jnp.float32)
    w0 = 1.0 - w1
    rows = jnp.arange(out_size)
    mat = jnp.zeros((out_size, in_size), jnp.float32)
    mat = mat.at[rows, idx0].add(w0)
    mat = mat.at[rows, idx1].add(w1)
    return mat


def _interp_kernel(wk_ref, x_ref, o_ref):
    # wk_ref: (K, M) pre-transposed Kronecker weight (block index constant
    #         across the grid -> stays resident in VMEM).
    # x_ref : (B, K) block of flattened input images.
    # o_ref : (B, M) block of flattened output images.
    w = wk_ref[...]
    # In f32 mode this cast is a no-op; in bf16 mode it drops the MXU onto the
    # native bf16 path (important on v5e) while keeping f32 accumulation.
    x = x_ref[...].astype(w.dtype)
    o_ref[...] = jnp.dot(x, w, preferred_element_type=jnp.float32).astype(o_ref.dtype)


def _choose_channel_block(nc: int) -> int:
    """Pick the channel (row) block size B.

    Rules:
      * multiple of 8 sublanes (required by the (8,128) block constraint);
      * capped at 1024 rows: 2x(1 MiB in) + 2x(4 MiB out) + 2x(1 MiB weight)
        = 12 MiB, inside the v5e 16 MiB scoped-VMEM default with double
        buffering, and a multiple of 256 for MXU-friendly M on v6e/v7x;
      * for mid-size problems (512 <= nc <= 1024), split into two balanced
        blocks (each >= 256 rows) so the v7x megacore gets >= 2 parallel
        grid steps instead of leaving one TensorCore idle.
    """
    nc8 = max(8, ((nc + 7) // 8) * 8)
    if nc8 < 512:
        # Too small to split usefully; a single (possibly ragged) block.
        return nc8
    if nc8 <= 1024:
        # Two balanced blocks, each >= 256 rows.
        return max(256, ((nc8 // 2 + 7) // 8) * 8)
    return 1024


@functools.partial(jax.jit, static_argnames=("size", "mode", "bf16_compute"))
def interpolation_forward(x, *, size, mode="bilinear", bf16_compute=False):
    """Pallas equivalent of F.interpolate(x, size, mode='bilinear').

    x: (N, C, H_in, W_in) float32 (NCHW, same as PyTorch).
    size: (H_out, W_out)
    bf16_compute: run the MXU matmul in bf16 (f32 accumulation). Recommended
        on v5e (avoids f32 MXU emulation); changes numerics at ~bf16 level.
    """
    if mode != "bilinear":
        # TODO(synk): only 'bilinear' (align_corners=False) is implemented here.
        raise NotImplementedError("only mode='bilinear' is supported")

    N, C, H_in, W_in = x.shape
    H_out, W_out = size
    K = H_in * W_in          # contraction dim (e.g. 256)
    M = H_out * W_out        # output lane dim (e.g. 1024)

    # 1-D bilinear matrices and their (pre-transposed) Kronecker product.
    wh = _build_interp_matrix(H_in, H_out)   # (H_out, H_in)
    ww = _build_interp_matrix(W_in, W_out)   # (W_out, W_in)
    # wk_t[h*W_in + w, o*W_out + p] = Wh[o, h] * Ww[p, w]
    wk_t = jnp.einsum("oh,pw->hwop", wh, ww).reshape(K, M)
    if bf16_compute:
        # 16->32 bilinear coefficients (0.0625/0.1875/0.25/0.5625/0.75/1.0)
        # are exact in bf16; only the activations lose precision.
        wk_t = wk_t.astype(jnp.bfloat16)

    nc = N * C
    B = _choose_channel_block(nc)
    grid = (pl.cdiv(nc, B),)   # ragged last block handled by Pallas

    x_flat = x.reshape(nc, K)  # pure reshape, no copy / no pad

    itemsize = jnp.dtype(x.dtype).itemsize
    cost = pl.CostEstimate(
        flops=2 * nc * K * M,
        transcendentals=0,
        bytes_accessed=nc * K * itemsize
        + nc * M * itemsize
        + K * M * jnp.dtype(wk_t.dtype).itemsize,
    )

    out_flat = pl.pallas_call(
        _interp_kernel,
        out_shape=jax.ShapeDtypeStruct((nc, M), x.dtype),
        grid_spec=pltpu.PrefetchScalarGridSpec(
            num_scalar_prefetch=0,
            grid=grid,
            in_specs=[
                pl.BlockSpec((K, M), lambda i: (0, 0)),   # weight, resident
                pl.BlockSpec((B, K), lambda i: (i, 0)),   # B channel-rows / step
            ],
            out_specs=pl.BlockSpec((B, M), lambda i: (i, 0)),
        ),
        compiler_params=pltpu.CompilerParams(
            dimension_semantics=("parallel",),
        ),
        cost_estimate=cost,
    )(wk_t, x_flat)

    return out_flat.reshape(N, C, H_out, W_out)


def _reference(x, size):
    wh = _build_interp_matrix(x.shape[2], size[0])
    ww = _build_interp_matrix(x.shape[3], size[1])
    return jnp.einsum("oh,nchw,pw->ncop", wh, x, ww)


if __name__ == "__main__":
    key = jax.random.PRNGKey(0)
    size = (32, 32)

    # Main check: the module's instantiation shape (N=2, C=4, 16x16 -> 32x32).
    N, C, H_in, W_in = 2, 4, 16, 16
    x = jax.random.normal(key, (N, C, H_in, W_in), dtype=jnp.float32)
    y = interpolation_forward(x, size=size, mode="bilinear")
    y = jax.block_until_ready(y)
    y_ref = _reference(x, size)
    assert y.shape == (N, C, size[0], size[1])
    assert jnp.allclose(y, y_ref, atol=1e-4, rtol=1e-4)

    # Ragged-grid check: nc not a multiple of the channel block -> the last
    # output block's garbage rows must be masked on store (no explicit pad).
    N2, C2 = 1, 600
    x2 = jax.random.normal(jax.random.PRNGKey(1), (N2, C2, H_in, W_in),
                           dtype=jnp.float32)
    y2 = jax.block_until_ready(
        interpolation_forward(x2, size=size, mode="bilinear"))
    y2_ref = _reference(x2, size)
    assert y2.shape == (N2, C2, size[0], size[1])
    assert jnp.allclose(y2, y2_ref, atol=1e-4, rtol=1e-4)

    print("KERNEL_OK")
</pallas_src>

<mosaic_0001>
module attributes {stable_mosaic.version = 11 : i64} {
  func.func private @main(%arg0: i32) attributes {dimension_semantics = [#tpu.dimension_semantics<core_parallel>], iteration_bounds = array<i64: 2>, tpu.core_type = #tpu.core_type<sc_scalar_subcore>, window_params = []} {
    return
  }
}

module attributes {stable_mosaic.version = 11 : i64} {
  func.func private @main(%arg0: i32) attributes {dimension_semantics = [#tpu.dimension_semantics<core_parallel>], iteration_bounds = array<i64: 2>, tpu.core_type = #tpu.core_type<sc_scalar_subcore>, window_params = []} {
    return
  }
}

module attributes {stable_mosaic.version = 11 : i64} {
  func.func @_interp_kernel(%arg0: i32, %arg1: memref<256x1024xf32, #tpu.memory_space<vmem>>, %arg2: memref<8x256xf32, #tpu.memory_space<vmem>>, %arg3: memref<8x1024xf32, #tpu.memory_space<vmem>>) attributes {dimension_semantics = [#tpu.dimension_semantics<parallel>], iteration_bounds = array<i64: 1>, scalar_prefetch = 0 : i64, scratch_operands = 0 : i64, tpu.core_type = #tpu.core_type<tc>, window_params = [{pipeline_mode = #tpu.pipeline_mode<synchronous>, transform_indices = @transform_0, window_bounds = array<i64: 256, 1024>}, {transform_indices = @transform_1, window_bounds = array<i64: 8, 256>}, {transform_indices = @transform_2, window_bounds = array<i64: 8, 1024>}]} {
    %c0 = arith.constant 0 : index
    %c0_0 = arith.constant 0 : index
    %0 = vector.load %arg1[%c0, %c0_0] : memref<256x1024xf32, #tpu.memory_space<vmem>>, vector<256x1024xf32>
    %c0_1 = arith.constant 0 : index
    %c0_2 = arith.constant 0 : index
    %1 = vector.load %arg2[%c0_1, %c0_2] : memref<8x256xf32, #tpu.memory_space<vmem>>, vector<8x256xf32>
    %cst = arith.constant dense<0.000000e+00> : vector<8x1024xf32>
    %2 = tpu.matmul %1, %0, %cst {dimension_numbers = #tpu.dot_dimension_numbers<[1], [0], [0], [1], [0, 0, 1, 1], [], []>} : vector<8x256xf32>, vector<256x1024xf32>, vector<8x1024xf32> -> vector<8x1024xf32>
    %c0_3 = arith.constant 0 : index
    %c0_4 = arith.constant 0 : index
    %3 = vector.load %arg3[%c0_3, %c0_4] : memref<8x1024xf32, #tpu.memory_space<vmem>>, vector<8x1024xf32>
    tpu.vector_store %arg3[%c0_3, %c0_4], %2 {strides = array<i32>} : memref<8x1024xf32, #tpu.memory_space<vmem>>, vector<8x1024xf32>,
    return
  }
  func.func @transform_0(%arg0: i32) -> (i32, i32) {
    %c0_i32 = arith.constant 0 : i32
    %c0_i32_0 = arith.constant 0 : i32
    %c0_i32_1 = arith.constant 0 : i32
    return %c0_i32, %c0_i32_0 : i32, i32
  }
  func.func @transform_1(%arg0: i32) -> (i32, i32) {
    %c0_i32 = arith.constant 0 : i32
    %c0_i32_0 = arith.constant 0 : i32
    return %arg0, %c0_i32 : i32, i32
  }
  func.func @transform_2(%arg0: i32) -> (i32, i32) {
    %c0_i32 = arith.constant 0 : i32
    %c0_i32_0 = arith.constant 0 : i32
    return %arg0, %c0_i32 : i32, i32
  }
}

</mosaic_0001>

<llo_original>
// kernel: interpolation_forward.1
$region0: #{interpolation_forward.1}
  #allocation0 [shape = 'u32[]', space=smem, size = 0x4, offset = 0x4, fixed_abs, tag = 'smem constant byte address 0x4 - core index']
  #allocation1 [shape = 'u32[144,128]{1,0:T(1,128)}', space=vmem, size = 0x12000, scoped, tag = 'internal scratch']
  %s0 = inlined_call_operand.vmem [shape: f32[256,1024], index: 0, kind: input, shape index: {}]
  %s1 = inlined_call_operand.vmem [shape: f32[8,256], index: 1, kind: input, shape index: {}]
  %s2 = inlined_call_operand.vmem [shape: f32[8,1024], index: 2, kind: output, shape index: {}]
  %s3 = sld [smem:[#allocation0]]
  $region18: #{interpolation_forward.1} parent=0
    _
  %s5 = ssub.s32 1, %s3
  %s6 = scalar_select 0, %s5, %s3
  // Predicated region
  $region2: #{interpolation_forward.1} parent=0 // pred_check
    _
  $region3: #{interpolation_forward.1} parent=0 // pred_check_branch
    %8 = sbr.rel (0) target = $region5
  $region4: #{interpolation_forward.1} parent=0 // pred_region
    _
  $region5: #{interpolation_forward.1} parent=0 // pred_fallthru
    _
  // Predicated region
  $region6: #{interpolation_forward.1} parent=0 // pred_check
    _
  $region7: #{interpolation_forward.1} parent=0 // pred_check_branch
    %10 = sbr.rel (0) target = $region9
  $region8: #{interpolation_forward.1} parent=0 // pred_region
    _
  $region9: #{interpolation_forward.1} parent=0 // pred_fallthru
    _
  %v11 = vld [vmem:[%s0] sm:$0xff]
  %v12 = vld [vmem:[%s0 + $0x8] sm:$0xff]
  %v13 = vld [vmem:[%s0 + $0x10] sm:$0xff]
  %v14 = vld [vmem:[%s0 + $0x18] sm:$0xff]
  %v15 = vld [vmem:[%s0 + $0x20] sm:$0xff]
  %v16 = vld [vmem:[%s0 + $0x28] sm:$0xff]
  %v17 = vld [vmem:[%s0 + $0x30] sm:$0xff]
  %v18 = vld [vmem:[%s0 + $0x38] sm:$0xff]
  %v19 = vld [vmem:[%s0 + $0x40] sm:$0xff]
  %v20 = vld [vmem:[%s0 + $0x48] sm:$0xff]
  %v21 = vld [vmem:[%s0 + $0x50] sm:$0xff]
  %v22 = vld [vmem:[%s0 + $0x58] sm:$0xff]
  %v23 = vld [vmem:[%s0 + $0x60] sm:$0xff]
  %v24 = vld [vmem:[%s0 + $0x68] sm:$0xff]
  %v25 = vld [vmem:[%s0 + $0x70] sm:$0xff]
  %v26 = vld [vmem:[%s0 + $0x78] sm:$0xff]
  %v27 = vld [vmem:[%s0 + $0x80] sm:$0xff]
  %v28 = vld [vmem:[%s0 + $0x88] sm:$0xff]
  %v29 = vld [vmem:[%s0 + $0x90] sm:$0xff]
  %v30 = vld [vmem:[%s0 + $0x98] sm:$0xff]
  %v31 = vld [vmem:[%s0 + $0xa0] sm:$0xff]
  %v32 = vld [vmem:[%s0 + $0xa8] sm:$0xff]
  %v33 = vld [vmem:[%s0 + $0xb0] sm:$0xff]
  %v34 = vld [vmem:[%s0 + $0xb8] sm:$0xff]
  %v35 = vld [vmem:[%s0 + $0xc0] sm:$0xff]
  %v36 = vld [vmem:[%s0 + $0xc8] sm:$0xff]
  %v37 = vld [vmem:[%s0 + $0xd0] sm:$0xff]
  %v38 = vld [vmem:[%s0 + $0xd8] sm:$0xff]
  %v39 = vld [vmem:[%s0 + $0xe0] sm:$0xff]
  %v40 = vld [vmem:[%s0 + $0xe8] sm:$0xff]
  %v41 = vld [vmem:[%s0 + $0xf0] sm:$0xff]
  %v42 = vld [vmem:[%s0 + $0xf8] sm:$0xff]
  %v43 = vld [vmem:[%s0 + $0x100] sm:$0xff]
  %v44 = vld [vmem:[%s0 + $0x108] sm:$0xff]
  %v45 = vld [vmem:[%s0 + $0x110] sm:$0xff]
  %v46 = vld [vmem:[%s0 + $0x118] sm:$0xff]
  %v47 = vld [vmem:[%s0 + $0x120] sm:$0xff]
  %v48 = vld [vmem:[%s0 + $0x128] sm:$0xff]
  %v49 = vld [vmem:[%s0 + $0x130] sm:$0xff]
  %v50 = vld [vmem:[%s0 + $0x138] sm:$0xff]
  %v51 = vld [vmem:[%s0 + $0x140] sm:$0xff]
  %v52 = vld [vmem:[%s0 + $0x148] sm:$0xff]
  %v53 = vld [vmem:[%s0 + $0x150] sm:$0xff]
  %v54 = vld [vmem:[%s0 + $0x158] sm:$0xff]
  %v55 = vld [vmem:[%s0 + $0x160] sm:$0xff]
  %v56 = vld [vmem:[%s0 + $0x168] sm:$0xff]
  %v57 = vld [vmem:[%s0 + $0x170] sm:$0xff]
  %v58 = vld [vmem:[%s0 + $0x178] sm:$0xff]
  %v59 = vld [vmem:[%s0 + $0x180] sm:$0xff]
  %v60 = vld [vmem:[%s0 + $0x188] sm:$0xff]
  %v61 = vld [vmem:[%s0 + $0x190] sm:$0xff]
  %v62 = vld [vmem:[%s0 + $0x198] sm:$0xff]
  %v63 = vld [vmem:[%s0 + $0x1a0] sm:$0xff]
  %v64 = vld [vmem:[%s0 + $0x1a8] sm:$0xff]
  %v65 = vld [vmem:[%s0 + $0x1b0] sm:$0xff]
  %v66 = vld [vmem:[%s0 + $0x1b8] sm:$0xff]
  %v67 = vld [vmem:[%s0 + $0x1c0] sm:$0xff]
  %v68 = vld [vmem:[%s0 + $0x1c8] sm:$0xff]
  %v69 = vld [vmem:[%s0 + $0x1d0] sm:$0xff]
  %v70 = vld [vmem:[%s0 + $0x1d8] sm:$0xff]
  %v71 = vld [vmem:[%s0 + $0x1e0] sm:$0xff]
  %v72 = vld [vmem:[%s0 + $0x1e8] sm:$0xff]
  %v73 = vld [vmem:[%s0 + $0x1f0] sm:$0xff]
  %v74 = vld [vmem:[%s0 + $0x1f8] sm:$0xff]
  %v75 = vld [vmem:[%s0 + $0x200] sm:$0xff]
  %v76 = vld [vmem:[%s0 + $0x208] sm:$0xff]
  %v77 = vld [vmem:[%s0 + $0x210] sm:$0xff]
  %v78 = vld [vmem:[%s0 + $0x218] sm:$0xff]
  %v79 = vld [vmem:[%s0 + $0x220] sm:$0xff]
  %v80 = vld [vmem:[%s0 + $0x228] sm:$0xff]
  %v81 = vld [vmem:[%s0 + $0x230] sm:$0xff]
  %v82 = vld [vmem:[%s0 + $0x238] sm:$0xff]
  %v83 = vld [vmem:[%s0 + $0x240] sm:$0xff]
  %v84 = vld [vmem:[%s0 + $0x248] sm:$0xff]
  %v85 = vld [vmem:[%s0 + $0x250] sm:$0xff]
  %v86 = vld [vmem:[%s0 + $0x258] sm:$0xff]
  %v87 = vld [vmem:[%s0 + $0x260] sm:$0xff]
  %v88 = vld [vmem:[%s0 + $0x268] sm:$0xff]
  %v89 = vld [vmem:[%s0 + $0x270] sm:$0xff]
  %v90 = vld [vmem:[%s0 + $0x278] sm:$0xff]
  %v91 = vld [vmem:[%s0 + $0x280] sm:$0xff]
  %v92 = vld [vmem:[%s0 + $0x288] sm:$0xff]
  %v93 = vld [vmem:[%s0 + $0x290] sm:$0xff]
  %v94 = vld [vmem:[%s0 + $0x298] sm:$0xff]
  %v95 = vld [vmem:[%s0 + $0x2a0] sm:$0xff]
  %v96 = vld [vmem:[%s0 + $0x2a8] sm:$0xff]
  %v97 = vld [vmem:[%s0 + $0x2b0] sm:$0xff]
  %v98 = vld [vmem:[%s0 + $0x2b8] sm:$0xff]
  %v99 = vld [vmem:[%s0 + $0x2c0] sm:$0xff]
  %v100 = vld [vmem:[%s0 + $0x2c8] sm:$0xff]
  %v101 = vld [vmem:[%s0 + $0x2d0] sm:$0xff]
  %v102 = vld [vmem:[%s0 + $0x2d8] sm:$0xff]
  %v103 = vld [vmem:[%s0 + $0x2e0] sm:$0xff]
  %v104 = vld [vmem:[%s0 + $0x2e8] sm:$0xff]
  %v105 = vld [vmem:[%s0 + $0x2f0] sm:$0xff]
  %v106 = vld [vmem:[%s0 + $0x2f8] sm:$0xff]
  %v107 = vld [vmem:[%s0 + $0x300] sm:$0xff]
  %v108 = vld [vmem:[%s0 + $0x308] sm:$0xff]
  %v109 = vld [vmem:[%s0 + $0x310] sm:$0xff]
  %v110 = vld [vmem:[%s0 + $0x318] sm:$0xff]
  %v111 = vld [vmem:[%s0 + $0x320] sm:$0xff]
  %v112 = vld [vmem:[%s0 + $0x328] sm:$0xff]
  %v113 = vld [vmem:[%s0 + $0x330] sm:$0xff]
  %v114 = vld [vmem:[%s0 + $0x338] sm:$0xff]
  %v115 = vld [vmem:[%s0 + $0x340] sm:$0xff]
  %v116 = vld [vmem:[%s0 + $0x348] sm:$0xff]
  %v117 = vld [vmem:[%s0 + $0x350] sm:$0xff]
  %v118 = vld [vmem:[%s0 + $0x358] sm:$0xff]
  %v119 = vld [vmem:[%s0 + $0x360] sm:$0xff]
  %v120 = vld [vmem:[%s0 + $0x368] sm:$0xff]
  %v121 = vld [vmem:[%s0 + $0x370] sm:$0xff]
  %v122 = vld [vmem:[%s0 + $0x378] sm:$0xff]
  %v123 = vld [vmem:[%s0 + $0x380] sm:$0xff]
  %v124 = vld [vmem:[%s0 + $0x388] sm:$0xff]
  %v125 = vld [vmem:[%s0 + $0x390] sm:$0xff]
  %v126 = vld [vmem:[%s0 + $0x398] sm:$0xff]
  %v127 = vld [vmem:[%s0 + $0x3a0] sm:$0xff]
  %v128 = vld [vmem:[%s0 + $0x3a8] sm:$0xff]
  %v129 = vld [vmem:[%s0 + $0x3b0] sm:$0xff]
  %v130 = vld [vmem:[%s0 + $0x3b8] sm:$0xff]
  %v131 = vld [vmem:[%s0 + $0x3c0] sm:$0xff]
  %v132 = vld [vmem:[%s0 + $0x3c8] sm:$0xff]
  %v133 = vld [vmem:[%s0 + $0x3d0] sm:$0xff]
  %v134 = vld [vmem:[%s0 + $0x3d8] sm:$0xff]
  %v135 = vld [vmem:[%s0 + $0x3e0] sm:$0xff]
  %v136 = vld [vmem:[%s0 + $0x3e8] sm:$0xff]
  %v137 = vld [vmem:[%s0 + $0x3f0] sm:$0xff]
  %v138 = vld [vmem:[%s0 + $0x3f8] sm:$0xff]
  %v139 = vld [vmem:[%s0 + $0x400] sm:$0xff]
  %v140 = vld [vmem:[%s0 + $0x408] sm:$0xff]
  %v141 = vld [vmem:[%s0 + $0x410] sm:$0xff]
  %v142 = vld [vmem:[%s0 + $0x418] sm:$0xff]
  %v143 = vld [vmem:[%s0 + $0x420] sm:$0xff]
  %v144 = vld [vmem:[%s0 + $0x428] sm:$0xff]
  %v145 = vld [vmem:[%s0 + $0x430] sm:$0xff]
  %v146 = vld [vmem:[%s0 + $0x438] sm:$0xff]
  %v147 = vld [vmem:[%s0 + $0x440] sm:$0xff]
  %v148 = vld [vmem:[%s0 + $0x448] sm:$0xff]
  %v149 = vld [vmem:[%s0 + $0x450] sm:$0xff]
  %v150 = vld [vmem:[%s0 + $0x458] sm:$0xff]
  %v151 = vld [vmem:[%s0 + $0x460] sm:$0xff]
  %v152 = vld [vmem:[%s0 + $0x468] sm:$0xff]
  %v153 = vld [vmem:[%s0 + $0x470] sm:$0xff]
  %v154 = vld [vmem:[%s0 + $0x478] sm:$0xff]
  %v155 = vld [vmem:[%s0 + $0x480] sm:$0xff]
  %v156 = vld [vmem:[%s0 + $0x488] sm:$0xff]
  %v157 = vld [vmem:[%s0 + $0x490] sm:$0xff]
  %v158 = vld [vmem:[%s0 + $0x498] sm:$0xff]
  %v159 = vld [vmem:[%s0 + $0x4a0] sm:$0xff]
  %v160 = vld [vmem:[%s0 + $0x4a8] sm:$0xff]
  %v161 = vld [vmem:[%s0 + $0x4b0] sm:$0xff]
  %v162 = vld [vmem:[%s0 + $0x4b8] sm:$0xff]
  %v163 = vld [vmem:[%s0 + $0x4c0] sm:$0xff]
  %v164 = vld [vmem:[%s0 + $0x4c8] sm:$0xff]
  %v165 = vld [vmem:[%s0 + $0x4d0] sm:$0xff]
  %v166 = vld [vmem:[%s0 + $0x4d8] sm:$0xff]
  %v167 = vld [vmem:[%s0 + $0x4e0] sm:$0xff]
  %v168 = vld [vmem:[%s0 + $0x4e8] sm:$0xff]
  %v169 = vld [vmem:[%s0 + $0x4f0] sm:$0xff]
  %v170 = vld [vmem:[%s0 + $0x4f8] sm:$0xff]
  %v171 = vld [vmem:[%s0 + $0x500] sm:$0xff]
  %v172 = vld [vmem:[%s0 + $0x508] sm:$0xff]
  %v173 = vld [vmem:[%s0 + $0x510] sm:$0xff]
  %v174 = vld [vmem:[%s0 + $0x518] sm:$0xff]
  %v175 = vld [vmem:[%s0 + $0x520] sm:$0xff]
  %v176 = vld [vmem:[%s0 + $0x528] sm:$0xff]
  %v177 = vld [vmem:[%s0 + $0x530] sm:$0xff]
  %v178 = vld [vmem:[%s0 + $0x538] sm:$0xff]
  %v179 = vld [vmem:[%s0 + $0x540] sm:$0xff]
  %v180 = vld [vmem:[%s0 + $0x548] sm:$0xff]
  %v181 = vld [vmem:[%s0 + $0x550] sm:$0xff]
  %v182 = vld [vmem:[%s0 + $0x558] sm:$0xff]
  %v183 = vld [vmem:[%s0 + $0x560] sm:$0xff]
  %v184 = vld [vmem:[%s0 + $0x568] sm:$0xff]
  %v185 = vld [vmem:[%s0 + $0x570] sm:$0xff]
  %v186 = vld [vmem:[%s0 + $0x578] sm:$0xff]
  %v187 = vld [vmem:[%s0 + $0x580] sm:$0xff]
  %v188 = vld [vmem:[%s0 + $0x588] sm:$0xff]
  %v189 = vld [vmem:[%s0 + $0x590] sm:$0xff]
  %v190 = vld [vmem:[%s0 + $0x598] sm:$0xff]
  %v191 = vld [vmem:[%s0 + $0x5a0] sm:$0xff]
  %v192 = vld [vmem:[%s0 + $0x5a8] sm:$0xff]
  %v193 = vld [vmem:[%s0 + $0x5b0] sm:$0xff]
  %v194 = vld [vmem:[%s0 + $0x5b8] sm:$0xff]
  %v195 = vld [vmem:[%s0 + $0x5c0] sm:$0xff]
  %v196 = vld [vmem:[%s0 + $0x5c8] sm:$0xff]
  %v197 = vld [vmem:[%s0 + $0x5d0] sm:$0xff]
  %v198 = vld [vmem:[%s0 + $0x5d8] sm:$0xff]
  %v199 = vld [vmem:[%s0 + $0x5e0] sm:$0xff]
  %v200 = vld [vmem:[%s0 + $0x5e8] sm:$0xff]
  %v201 = vld [vmem:[%s0 + $0x5f0] sm:$0xff]
  %v202 = vld [vmem:[%s0 + $0x5f8] sm:$0xff]
  %v203 = vld [vmem:[%s0 + $0x600] sm:$0xff]
  %v204 = vld [vmem:[%s0 + $0x608] sm:$0xff]
  %v205 = vld [vmem:[%s0 + $0x610] sm:$0xff]
  %v206 = vld [vmem:[%s0 + $0x618] sm:$0xff]
  %v207 = vld [vmem:[%s0 + $0x620] sm:$0xff]
  %v208 = vld [vmem:[%s0 + $0x628] sm:$0xff]
  %v209 = vld [vmem:[%s0 + $0x630] sm:$0xff]
  %v210 = vld [vmem:[%s0 + $0x638] sm:$0xff]
  %v211 = vld [vmem:[%s0 + $0x640] sm:$0xff]
  %v212 = vld [vmem:[%s0 + $0x648] sm:$0xff]
  %v213 = vld [vmem:[%s0 + $0x650] sm:$0xff]
  %v214 = vld [vmem:[%s0 + $0x658] sm:$0xff]
  %v215 = vld [vmem:[%s0 + $0x660] sm:$0xff]
  %v216 = vld [vmem:[%s0 + $0x668] sm:$0xff]
  %v217 = vld [vmem:[%s0 + $0x670] sm:$0xff]
  %v218 = vld [vmem:[%s0 + $0x678] sm:$0xff]
  %v219 = vld [vmem:[%s0 + $0x680] sm:$0xff]
  %v220 = vld [vmem:[%s0 + $0x688] sm:$0xff]
  %v221 = vld [vmem:[%s0 + $0x690] sm:$0xff]
  %v222 = vld [vmem:[%s0 + $0x698] sm:$0xff]
  %v223 = vld [vmem:[%s0 + $0x6a0] sm:$0xff]
  %v224 = vld [vmem:[%s0 + $0x6a8] sm:$0xff]
  %v225 = vld [vmem:[%s0 + $0x6b0] sm:$0xff]
  %v226 = vld [vmem:[%s0 + $0x6b8] sm:$0xff]
  %v227 = vld [vmem:[%s0 + $0x6c0] sm:$0xff]
  %v228 = vld [vmem:[%s0 + $0x6c8] sm:$0xff]
  %v229 = vld [vmem:[%s0 + $0x6d0] sm:$0xff]
  %v230 = vld [vmem:[%s0 + $0x6d8] sm:$0xff]
  %v231 = vld [vmem:[%s0 + $0x6e0] sm:$0xff]
  %v232 = vld [vmem:[%s0 + $0x6e8] sm:$0xff]
  %v233 = vld [vmem:[%s0 + $0x6f0] sm:$0xff]
  %v234 = vld [vmem:[%s0 + $0x6f8] sm:$0xff]
  %v235 = vld [vmem:[%s0 + $0x700] sm:$0xff]
  %v236 = vld [vmem:[%s0 + $0x708] sm:$0xff]
  %v237 = vld [vmem:[%s0 + $0x710] sm:$0xff]
  %v238 = vld [vmem:[%s0 + $0x718] sm:$0xff]
  %v239 = vld [vmem:[%s0 + $0x720] sm:$0xff]
  %v240 = vld [vmem:[%s0 + $0x728] sm:$0xff]
  %v241 = vld [vmem:[%s0 + $0x730] sm:$0xff]
  %v242 = vld [vmem:[%s0 + $0x738] sm:$0xff]
  %v243 = vld [vmem:[%s0 + $0x740] sm:$0xff]
  %v244 = vld [vmem:[%s0 + $0x748] sm:$0xff]
  %v245 = vld [vmem:[%s0 + $0x750] sm:$0xff]
  %v246 = vld [vmem:[%s0 + $0x758] sm:$0xff]
  %v247 = vld [vmem:[%s0 + $0x760] sm:$0xff]
  %v248 = vld [vmem:[%s0 + $0x768] sm:$0xff]
  %v249 = vld [vmem:[%s0 + $0x770] sm:$0xff]
  %v250 = vld [vmem:[%s0 + $0x778] sm:$0xff]
  %v251 = vld [vmem:[%s0 + $0x780] sm:$0xff]
  %v252 = vld [vmem:[%s0 + $0x788] sm:$0xff]
  %v253 = vld [vmem:[%s0 + $0x790] sm:$0xff]
  %v254 = vld [vmem:[%s0 + $0x798] sm:$0xff]
  %v255 = vld [vmem:[%s0 + $0x7a0] sm:$0xff]
  %v256 = vld [vmem:[%s0 + $0x7a8] sm:$0xff]
  %v257 = vld [vmem:[%s0 + $0x7b0] sm:$0xff]
  %v258 = vld [vmem:[%s0 + $0x7b8] sm:$0xff]
  %v259 = vld [vmem:[%s0 + $0x7c0] sm:$0xff]
  %v260 = vld [vmem:[%s0 + $0x7c8] sm:$0xff]
  %v261 = vld [vmem:[%s0 + $0x7d0] sm:$0xff]
  %v262 = vld [vmem:[%s0 + $0x7d8] sm:$0xff]
  %v263 = vld [vmem:[%s0 + $0x7e0] sm:$0xff]
  %v264 = vld [vmem:[%s0 + $0x7e8] sm:$0xff]
  %v265 = vld [vmem:[%s0 + $0x7f0] sm:$0xff]
  %v266 = vld [vmem:[%s0 + $0x7f8] sm:$0xff]
  %v267 = vld [vmem:[%s1] sm:$0xff]
  %v268 = vld [vmem:[%s1 + $0x8] sm:$0xff]
  %269 = vmatprep.subr.mxu0 %v12
  %270 = vmatpush1.msra.mxu0 %v11
  %271 = vmatprep.subr.mxu0 %v20
  %272 = vmatpush1.msra.mxu0 %v19
  %273 = vmatprep.subr.mxu0 %v28
  %274 = vmatpush1.msra.mxu0 %v27
  %275 = vmatprep.subr.mxu0 %v36
  %276 = vmatpush1.msra.mxu0 %v35
  %277 = vmatprep.subr.mxu0 %v44
  %278 = vmatpush1.msra.mxu0 %v43
  %279 = vmatprep.subr.mxu0 %v52
  %280 = vmatpush1.msra.mxu0 %v51
  %281 = vmatprep.subr.mxu0 %v60
  %282 = vmatpush1.msra.mxu0 %v59
  %283 = vmatprep.subr.mxu0 %v68
  %284 = vmatpush1.msra.mxu0 %v67
  %285 = vmatprep.subr.mxu0 %v76
  %286 = vmatpush1.msra.mxu0 %v75
  %287 = vmatprep.subr.mxu0 %v84
  %288 = vmatpush1.msra.mxu0 %v83
  %289 = vmatprep.subr.mxu0 %v92
  %290 = vmatpush1.msra.mxu0 %v91
  %291 = vmatprep.subr.mxu0 %v100
  %292 = vmatpush1.msra.mxu0 %v99
  %293 = vmatprep.subr.mxu0 %v108
  %294 = vmatpush1.msra.mxu0 %v107
  %295 = vmatprep.subr.mxu0 %v116
  %296 = vmatpush1.msra.mxu0 %v115
  %297 = vmatprep.subr.mxu0 %v124
  %298 = vmatpush1.msra.mxu0 %v123
  %299 = vmatprep.subr.mxu0 %v132
  %300 = vmatpush1.msra.mxu0 %v131
  %301 = vmatprep.subr.mxu0 %v140
  %302 = vmatpush1.msra.mxu0 %v139
  %303 = vmatprep.subr.mxu0 %v148
  %304 = vmatpush1.msra.mxu0 %v147
  %305 = vmatprep.subr.mxu0 %v156
  %306 = vmatpush1.msra.mxu0 %v155
  %307 = vmatprep.subr.mxu0 %v164
  %308 = vmatpush1.msra.mxu0 %v163
  %309 = vmatprep.subr.mxu0 %v172
  %310 = vmatpush1.msra.mxu0 %v171
  %311 = vmatprep.subr.mxu0 %v180
  %312 = vmatpush1.msra.mxu0 %v179
  %313 = vmatprep.subr.mxu0 %v188
  %314 = vmatpush1.msra.mxu0 %v187
  %315 = vmatprep.subr.mxu0 %v196
  %316 = vmatpush1.msra.mxu0 %v195
  %317 = vmatprep.subr.mxu0 %v204
  %318 = vmatpush1.msra.mxu0 %v203
  %319 = vmatprep.subr.mxu0 %v212
  %320 = vmatpush1.msra.mxu0 %v211
  %321 = vmatprep.subr.mxu0 %v220
  %322 = vmatpush1.msra.mxu0 %v219
  %323 = vmatprep.subr.mxu0 %v228
  %324 = vmatpush1.msra.mxu0 %v227
  %325 = vmatprep.subr.mxu0 %v236
  %326 = vmatpush1.msra.mxu0 %v235
  %327 = vmatprep.subr.mxu0 %v244
  %328 = vmatpush1.msra.mxu0 %v243
  %329 = vmatprep.subr.mxu0 %v252
  %330 = vmatpush1.msra.mxu0 %v251
  %331 = vmatprep.subr.mxu0 %v260
  %332 = vmatpush1.msra.mxu0 %v259
  %333 = vmatprep.mubr.f32.mxu0 %v268
  %334 = vmatmul.mubr.f32.gmra.mrb[0].mxu0 %v267
  %v335 = vpop.f32.mrb[0].mxu0
  %v336 = vadd.f32 0.0, %v335
  %v337 = vpop.f32.mrb[0].mxu0
  %v338 = vadd.f32 0.0, %v337
  %339 = vdwg.mxu0
  %340 = vmatprep.subr.mxu0 %v14
  %341 = vmatpush1.msra.mxu0 %v13
  %342 = vmatprep.subr.mxu0 %v22
  %343 = vmatpush1.msra.mxu0 %v21
  %344 = vmatprep.subr.mxu0 %v30
  %345 = vmatpush1.msra.mxu0 %v29
  %346 = vmatprep.subr.mxu0 %v38
  %347 = vmatpush1.msra.mxu0 %v37
  %348 = vmatprep.subr.mxu0 %v46
  %349 = vmatpush1.msra.mxu0 %v45
  %350 = vmatprep.subr.mxu0 %v54
  %351 = vmatpush1.msra.mxu0 %v53
  %352 = vmatprep.subr.mxu0 %v62
  %353 = vmatpush1.msra.mxu0 %v61
  %354 = vmatprep.subr.mxu0 %v70
  %355 = vmatpush1.msra.mxu0 %v69
  %356 = vmatprep.subr.mxu0 %v78
  %357 = vmatpush1.msra.mxu0 %v77
  %358 = vmatprep.subr.mxu0 %v86
  %359 = vmatpush1.msra.mxu0 %v85
  %360 = vmatprep.subr.mxu0 %v94
  %361 = vmatpush1.msra.mxu0 %v93
  %362 = vmatprep.subr.mxu0 %v102
  %363 = vmatpush1.msra.mxu0 %v101
  %364 = vmatprep.subr.mxu0 %v110
  %365 = vmatpush1.msra.mxu0 %v109
  %366 = vmatprep.subr.mxu0 %v118
  %367 = vmatpush1.msra.mxu0 %v117
  %368 = vmatprep.subr.mxu0 %v126
  %369 = vmatpush1.msra.mxu0 %v125
  %370 = vmatprep.subr.mxu0 %v134
  %371 = vmatpush1.msra.mxu0 %v133
  %372 = vmatprep.subr.mxu0 %v142
  %373 = vmatpush1.msra.mxu0 %v141
  %374 = vmatprep.subr.mxu0 %v150
  %375 = vmatpush1.msra.mxu0 %v149
  %376 = vmatprep.subr.mxu0 %v158
  %377 = vmatpush1.msra.mxu0 %v157
  %378 = vmatprep.subr.mxu0 %v166
  %379 = vmatpush1.msra.mxu0 %v165
  %380 = vmatprep.subr.mxu0 %v174
  %381 = vmatpush1.msra.mxu0 %v173
  %382 = vmatprep.subr.mxu0 %v182
  %383 = vmatpush1.msra.mxu0 %v181
  %384 = vmatprep.subr.mxu0 %v190
  %385 = vmatpush1.msra.mxu0 %v189
  %386 = vmatprep.subr.mxu0 %v198
  %387 = vmatpush1.msra.mxu0 %v197
  %388 = vmatprep.subr.mxu0 %v206
  %389 = vmatpush1.msra.mxu0 %v205
  %390 = vmatprep.subr.mxu0 %v214
  %391 = vmatpush1.msra.mxu0 %v213
  %392 = vmatprep.subr.mxu0 %v222
  %393 = vmatpush1.msra.mxu0 %v221
  %394 = vmatprep.subr.mxu0 %v230
  %395 = vmatpush1.msra.mxu0 %v229
  %396 = vmatprep.subr.mxu0 %v238
  %397 = vmatpush1.msra.mxu0 %v237
  %398 = vmatprep.subr.mxu0 %v246
  %399 = vmatpush1.msra.mxu0 %v245
  %400 = vmatprep.subr.mxu0 %v254
  %401 = vmatpush1.msra.mxu0 %v253
  %402 = vmatprep.subr.mxu0 %v262
  %403 = vmatpush1.msra.mxu0 %v261
  %404 = vmatprep.mubr.f32.mxu0 %v268
  %405 = vmatmul.mubr.f32.gmra.mrb[0].mxu0 %v267
  %v406 = vpop.f32.mrb[0].mxu0
  %v407 = vadd.f32 0.0, %v406
  %v408 = vpop.f32.mrb[0].mxu0
  %v409 = vadd.f32 0.0, %v408
  %410 = vdwg.mxu0
  %411 = vmatprep.subr.mxu0 %v16
  %412 = vmatpush1.msra.mxu0 %v15
  %413 = vmatprep.subr.mxu0 %v24
  %414 = vmatpush1.msra.mxu0 %v23
  %415 = vmatprep.subr.mxu0 %v32
  %416 = vmatpush1.msra.mxu0 %v31
  %417 = vmatprep.subr.mxu0 %v40
  %418 = vmatpush1.msra.mxu0 %v39
  %419 = vmatprep.subr.mxu0 %v48
  %420 = vmatpush1.msra.mxu0 %v47
  %421 = vmatprep.subr.mxu0 %v56
  %422 = vmatpush1.msra.mxu0 %v55
  %423 = vmatprep.subr.mxu0 %v64
  %424 = vmatpush1.msra.mxu0 %v63
  %425 = vmatprep.subr.mxu0 %v72
  %426 = vmatpush1.msra.mxu0 %v71
  %427 = vmatprep.subr.mxu0 %v80
  %428 = vmatpush1.msra.mxu0 %v79
  %429 = vmatprep.subr.mxu0 %v88
  %430 = vmatpush1.msra.mxu0 %v87
  %431 = vmatprep.subr.mxu0 %v96
  %432 = vmatpush1.msra.mxu0 %v95
  %433 = vmatprep.subr.mxu0 %v104
  %434 = vmatpush1.msra.mxu0 %v103
  %435 = vmatprep.subr.mxu0 %v112
  %436 = vmatpush1.msra.mxu0 %v111
  %437 = vmatprep.subr.mxu0 %v120
  %438 = vmatpush1.msra.mxu0 %v119
  %439 = vmatprep.subr.mxu0 %v128
  %440 = vmatpush1.msra.mxu0 %v127
  %441 = vmatprep.subr.mxu0 %v136
  %442 = vmatpush1.msra.mxu0 %v135
  %443 = vmatprep.subr.mxu0 %v144
  %444 = vmatpush1.msra.mxu0 %v143
  %445 = vmatprep.subr.mxu0 %v152
  %446 = vmatpush1.msra.mxu0 %v151
  %447 = vmatprep.subr.mxu0 %v160
  %448 = vmatpush1.msra.mxu0 %v159
  %449 = vmatprep.subr.mxu0 %v168
  %450 = vmatpush1.msra.mxu0 %v167
  %451 = vmatprep.subr.mxu0 %v176
  %452 = vmatpush1.msra.mxu0 %v175
  %453 = vmatprep.subr.mxu0 %v184
  %454 = vmatpush1.msra.mxu0 %v183
  %455 = vmatprep.subr.mxu0 %v192
  %456 = vmatpush1.msra.mxu0 %v191
  %457 = vmatprep.subr.mxu0 %v200
  %458 = vmatpush1.msra.mxu0 %v199
  %459 = vmatprep.subr.mxu0 %v208
  %460 = vmatpush1.msra.mxu0 %v207
  %461 = vmatprep.subr.mxu0 %v216
  %462 = vmatpush1.msra.mxu0 %v215
  %463 = vmatprep.subr.mxu0 %v224
  %464 = vmatpush1.msra.mxu0 %v223
  %465 = vmatprep.subr.mxu0 %v232
  %466 = vmatpush1.msra.mxu0 %v231
  %467 = vmatprep.subr.mxu0 %v240
  %468 = vmatpush1.msra.mxu0 %v239
  %469 = vmatprep.subr.mxu0 %v248
  %470 = vmatpush1.msra.mxu0 %v247
  %471 = vmatprep.subr.mxu0 %v256
  %472 = vmatpush1.msra.mxu0 %v255
  %473 = vmatprep.subr.mxu0 %v264
  %474 = vmatpush1.msra.mxu0 %v263
  %475 = vmatprep.mubr.f32.mxu0 %v268
  %476 = vmatmul.mubr.f32.gmra.mrb[0].mxu0 %v267
  %v477 = vpop.f32.mrb[0].mxu0
  %v478 = vadd.f32 0.0, %v477
  %v479 = vpop.f32.mrb[0].mxu0
  %v480 = vadd.f32 0.0, %v479
  %481 = vdwg.mxu0
  %482 = vmatprep.subr.mxu0 %v18
  %483 = vmatpush1.msra.mxu0 %v17
  %484 = vmatprep.subr.mxu0 %v26
  %485 = vmatpush1.msra.mxu0 %v25
  %486 = vmatprep.subr.mxu0 %v34
  %487 = vmatpush1.msra.mxu0 %v33
  %488 = vmatprep.subr.mxu0 %v42
  %489 = vmatpush1.msra.mxu0 %v41
  %490 = vmatprep.subr.mxu0 %v50
  %491 = vmatpush1.msra.mxu0 %v49
  %492 = vmatprep.subr.mxu0 %v58
  %493 = vmatpush1.msra.mxu0 %v57
  %494 = vmatprep.subr.mxu0 %v66
  %495 = vmatpush1.msra.mxu0 %v65
  %496 = vmatprep.subr.mxu0 %v74
  %497 = vmatpush1.msra.mxu0 %v73
  %498 = vmatprep.subr.mxu0 %v82
  %499 = vmatpush1.msra.mxu0 %v81
  %500 = vmatprep.subr.mxu0 %v90
  %501 = vmatpush1.msra.mxu0 %v89
  %502 = vmatprep.subr.mxu0 %v98
  %503 = vmatpush1.msra.mxu0 %v97
  %504 = vmatprep.subr.mxu0 %v106
  %505 = vmatpush1.msra.mxu0 %v105
  %506 = vmatprep.subr.mxu0 %v114
  %507 = vmatpush1.msra.mxu0 %v113
  %508 = vmatprep.subr.mxu0 %v122
  %509 = vmatpush1.msra.mxu0 %v121
  %510 = vmatprep.subr.mxu0 %v130
  %511 = vmatpush1.msra.mxu0 %v129
  %512 = vmatprep.subr.mxu0 %v138
  %513 = vmatpush1.msra.mxu0 %v137
  %514 = vmatprep.subr.mxu0 %v146
  %515 = vmatpush1.msra.mxu0 %v145
  %516 = vmatprep.subr.mxu0 %v154
  %517 = vmatpush1.msra.mxu0 %v153
  %518 = vmatprep.subr.mxu0 %v162
  %519 = vmatpush1.msra.mxu0 %v161
  %520 = vmatprep.subr.mxu0 %v170
  %521 = vmatpush1.msra.mxu0 %v169
  %522 = vmatprep.subr.mxu0 %v178
  %523 = vmatpush1.msra.mxu0 %v177
  %524 = vmatprep.subr.mxu0 %v186
  %525 = vmatpush1.msra.mxu0 %v185
  %526 = vmatprep.subr.mxu0 %v194
  %527 = vmatpush1.msra.mxu0 %v193
  %528 = vmatprep.subr.mxu0 %v202
  %529 = vmatpush1.msra.mxu0 %v201
  %530 = vmatprep.subr.mxu0 %v210
  %531 = vmatpush1.msra.mxu0 %v209
  %532 = vmatprep.subr.mxu0 %v218
  %533 = vmatpush1.msra.mxu0 %v217
  %534 = vmatprep.subr.mxu0 %v226
  %535 = vmatpush1.msra.mxu0 %v225
  %536 = vmatprep.subr.mxu0 %v234
  %537 = vmatpush1.msra.mxu0 %v233
  %538 = vmatprep.subr.mxu0 %v242
  %539 = vmatpush1.msra.mxu0 %v241
  %540 = vmatprep.subr.mxu0 %v250
  %541 = vmatpush1.msra.mxu0 %v249
  %542 = vmatprep.subr.mxu0 %v258
  %543 = vmatpush1.msra.mxu0 %v257
  %544 = vmatprep.subr.mxu0 %v266
  %545 = vmatpush1.msra.mxu0 %v265
  %546 = vmatprep.mubr.f32.mxu0 %v268
  %547 = vmatmul.mubr.f32.gmra.mrb[0].mxu0 %v267
  %v548 = vpop.f32.mrb[0].mxu0
  %v549 = vadd.f32 0.0, %v548
  %v550 = vpop.f32.mrb[0].mxu0
  %v551 = vadd.f32 0.0, %v550
  %552 = vdwg.mxu0
  %553 = vst [vmem:[%s2] sm:$0xff] %v336
  %554 = vst [vmem:[%s2 + $0x8] sm:$0xff] %v338
  %555 = vst [vmem:[%s2 + $0x10] sm:$0xff] %v407
  %556 = vst [vmem:[%s2 + $0x18] sm:$0xff] %v409
  %557 = vst [vmem:[%s2 + $0x20] sm:$0xff] %v478
  %558 = vst [vmem:[%s2 + $0x28] sm:$0xff] %v480
  %559 = vst [vmem:[%s2 + $0x30] sm:$0xff] %v549
  %560 = vst [vmem:[%s2 + $0x38] sm:$0xff] %v551
  // Predicated region
  $region10: #{interpolation_forward.1} parent=0 // pred_check
    _
  $region11: #{interpolation_forward.1} parent=0 // pred_check_branch
    %562 = sbr.rel (0) target = $region13
  $region12: #{interpolation_forward.1} parent=0 // pred_region
    _
  $region13: #{interpolation_forward.1} parent=0 // pred_fallthru
    _
  // Predicated region
  $region14: #{interpolation_forward.1} parent=0 // pred_check
    _
  $region15: #{interpolation_forward.1} parent=0 // pred_check_branch
    %564 = sbr.rel (0) target = $region17
  $region16: #{interpolation_forward.1} parent=0 // pred_region
    _
  $region17: #{interpolation_forward.1} parent=0 // pred_fallthru
    _

</llo_original>
